<compile_context>
chip_gen: v7x
topology: tpu7x:2x2x1
jax: 0.10.0
libtpu: 0.0.40
codegen_flags: <defaults>
</compile_context>

<pallas_src>
import jax
import jax.numpy as jnp
from jax.experimental import pallas as pl
from jax.experimental.pallas import tpu as pltpu

POOL_SIZE = 2
_MASK_VALUE = -jnp.finfo(jnp.float32).max


def _make_kernel(pool_size, has_mask):
    """Build the grid-step kernel.

    Refs per grid step (batch squeezed, n_pool tiled):
      x_ref   : (p, d, T)   VMEM  -- pool-slot-major input tile
      w_ref   : (d, d)      VMEM  -- 1x1 conv weight, constant over the grid
      mask_ref: (p, 1, T)   VMEM  -- 1.0 where the slot is module padding (optional)
      o_ref   : (d, T)      VMEM  -- pooled output tile
    """

    def kernel(*refs):
        if has_mask:
            x_ref, w_ref, mask_ref, o_ref = refs
        else:
            x_ref, w_ref, o_ref = refs
            mask_ref = None

        w = w_ref[...]

        if pool_size == 2:
            # softmax over 2 slots == sigmoid of the logit difference; one matmul.
            x0 = x_ref[0]
            x1 = x_ref[1]
            dx = x0 - x1
            ldiff = jnp.dot(w, dx, preferred_element_type=jnp.float32)
            a0 = 1.0 / (1.0 + jnp.exp(-ldiff))  # softmax weight of slot 0
            if mask_ref is not None:
                # Padding (pool_size=2) can only land in slot 1 of the final pooled
                # column -> its softmax weight for slot 0 is exactly 1. Applying the
                # mask to a0 (not to ldiff) avoids any -finfo.max overflow and gives
                # out == x0 exactly on padded columns (x1 is zero-padded).
                a0 = jnp.where(mask_ref[1] > 0.0, 1.0, a0)
            o_ref[...] = (x1 + dx * a0).astype(o_ref.dtype)
        else:
            # Generic pool size: online masked softmax streamed over the slots
            # (bounded number of live (d, T) values -> no vreg spills at large d).
            x0 = x_ref[0]
            l0 = jnp.dot(w, x0, preferred_element_type=jnp.float32)
            if mask_ref is not None:
                l0 = jnp.where(mask_ref[0] > 0.0, _MASK_VALUE, l0)
            m = l0
            s = jnp.ones_like(l0)
            acc = x0
            for j in range(1, pool_size):
                xj = x_ref[j]
                lj = jnp.dot(w, xj, preferred_element_type=jnp.float32)
                if mask_ref is not None:
                    lj = jnp.where(mask_ref[j] > 0.0, _MASK_VALUE, lj)
                m_new = jnp.maximum(m, lj)
                alpha = jnp.exp(m - m_new)
                p = jnp.exp(lj - m_new)
                s = s * alpha + p
                acc = acc * alpha + xj * p
                m = m_new
            o_ref[...] = (acc / s).astype(o_ref.dtype)

    return kernel


def _choose_tile(n_pool, d, pool_size, vmem_budget_bytes):
    """Pick a lane-aligned (128-multiple) n_pool tile.

    Target ~3 MiB of x per grid step (HBM-roofline sweet spot: per-step bytes in
    the 1-4 MiB range hit ~85% of roofline, tiny tiles sit at ~30%), capped so
    double-buffered x/out blocks + the (double-buffered) resident weight stay
    under `vmem_budget_bytes` (v7x-safe default).
    """
    if n_pool <= 256:
        return n_pool  # tiny problem: single full-extent tile is fine
    bytes_per_col_x = pool_size * d * 4
    bytes_per_col_io = (pool_size + 1) * d * 4          # x block + out block, per buffer
    target = max(128, (3 * (1 << 20)) // bytes_per_col_x)
    w_bytes = 2 * d * d * 4                             # double-buffered weight block
    slack = 2 * (1 << 20)
    avail = max(vmem_budget_bytes - w_bytes - slack, 0)
    budget = max(128, avail // (2 * bytes_per_col_io))
    tile = min(target, budget, 8192)
    tile = max(128, (tile // 128) * 128)
    if tile >= n_pool:
        return n_pool
    return tile


def attention_pool(x, w, pool_size=POOL_SIZE, tile_np=None,
                   vmem_budget_bytes=40 * (1 << 20)):
    """x: (b, dim, n) float32; w: (dim, dim) float32 (1x1 conv weight squeezed)."""
    b, d, n = x.shape
    remainder = n % pool_size
    needs_padding = remainder > 0

    # Module-faithful padding: pad the sequence by `remainder` (exactly like the
    # PyTorch module; equals pad-to-multiple only for pool_size=2).
    n_pad = n + remainder if needs_padding else n
    assert n_pad % pool_size == 0, "padded length must divide pool_size"
    n_pool = n_pad // pool_size

    # Tile choice (d-aware + VMEM-budgeted). If n_pool is not a multiple of the
    # tile, pad up to the next multiple (cheap: <tile extra pooled columns) and
    # slice the output back — never fall back to a single huge tile.
    if tile_np is None:
        tile_np = _choose_tile(n_pool, d, pool_size, vmem_budget_bytes)
    if tile_np >= n_pool:
        tile_np = n_pool
        n_tiles = 1
        n_pool_pad = n_pool
    else:
        assert tile_np % 128 == 0, "tile_np must be a multiple of 128 (or >= n_pool)"
        n_tiles = -(-n_pool // tile_np)
        n_pool_pad = n_tiles * tile_np

    # Single zero-pad covering both the module padding and lane-alignment padding.
    total_pad = n_pool_pad * pool_size - n
    if total_pad > 0:
        x = jnp.pad(x, ((0, 0), (0, 0), (0, total_pad)))

    # 'b d (n p) -> b p d n': pool slots become a tiny leading axis so the lane
    # axis of every kernel tile is the pooled-position axis (lane dense).
    # TODO(synk): fuse this deinterleave into the kernel to save a full HBM pass.
    x_r = x.reshape(b, d, n_pool_pad, pool_size).transpose(0, 3, 1, 2)

    inputs = [x_r, w]
    in_specs = [
        # x tile: batch squeezed, full pool & channel extent, n_pool tiled.
        pl.BlockSpec((None, pool_size, d, tile_np), lambda i, t: (i, 0, 0, t)),
        # weight: constant block index -> DMA'd once, stays resident in VMEM.
        pl.BlockSpec((d, d), lambda i, t: (0, 0)),
    ]

    if needs_padding:
        # Per-(slot, pooled position) padding flags for the module padding only
        # (lane-alignment padding columns are zero-filled and sliced off, so they
        # need no mask). Only the module-pad positions get masked_fill semantics.
        pos = jnp.arange(n_pool_pad * pool_size)
        flags = ((pos >= n) & (pos < n + remainder)).astype(jnp.float32)
        mask = flags.reshape(n_pool_pad, pool_size).T.reshape(pool_size, 1, n_pool_pad)
        inputs.append(mask)
        in_specs.append(
            pl.BlockSpec((pool_size, 1, tile_np), lambda i, t: (0, 0, t))
        )

    # VMEM budget derived from actual block sizes (double-buffered) + headroom.
    x_blk = pool_size * d * tile_np * 4
    o_blk = d * tile_np * 4
    m_blk = pool_size * tile_np * 4 if needs_padding else 0
    w_blk = d * d * 4
    need = 2 * (x_blk + o_blk + m_blk) + 2 * w_blk + 2 * (1 << 20)
    vmem_limit = int(min(max(need, 32 * (1 << 20)), 100 * (1 << 20)))

    kernel = _make_kernel(pool_size, needs_padding)

    out = pl.pallas_call(
        kernel,
        out_shape=jax.ShapeDtypeStruct((b, d, n_pool_pad), jnp.float32),
        grid_spec=pltpu.PrefetchScalarGridSpec(
            num_scalar_prefetch=0,
            grid=(b, n_tiles),
            in_specs=in_specs,
            out_specs=pl.BlockSpec((None, d, tile_np), lambda i, t: (i, 0, t)),
        ),
        compiler_params=pltpu.CompilerParams(
            # Both grid axes are independent -> megacore / v7x's 2 TCs can shard
            # either one (matters when b == 1).
            dimension_semantics=("parallel", "parallel"),
            vmem_limit_bytes=vmem_limit,
        ),
    )(*inputs)

    if n_pool_pad != n_pool:
        out = out[:, :, :n_pool]
    return out


def attention_pool_reference(x, w, pool_size=POOL_SIZE):
    """Pure-JAX reference mirroring the PyTorch forward."""
    b, d, n = x.shape
    remainder = n % pool_size
    mask_value = -jnp.finfo(jnp.float32).max
    if remainder > 0:
        x = jnp.pad(x, ((0, 0), (0, 0), (0, remainder)))
        pad_flags = jnp.concatenate(
            [jnp.zeros((n,), jnp.bool_), jnp.ones((remainder,), jnp.bool_)]
        )
    else:
        pad_flags = jnp.zeros((n,), jnp.bool_)
    n_pad = x.shape[-1]
    n_pool = n_pad // pool_size
    xr = x.reshape(b, d, n_pool, pool_size)                     # b d n p
    logits = jnp.einsum("oi,binp->bonp", w, xr)
    mask = pad_flags.reshape(1, 1, n_pool, pool_size)
    logits = jnp.where(mask, mask_value, logits)
    attn = jax.nn.softmax(logits, axis=-1)
    return (xr * attn).sum(axis=-1)


if __name__ == "__main__":
    key = jax.random.PRNGKey(0)
    k1, k2, k3 = jax.random.split(key, 3)
    b, dim = 2, 16

    # nn.init.dirac_ on Conv2d(dim, dim, 1) -> identity, then *2.
    w = 2.0 * jnp.eye(dim, dtype=jnp.float32)

    # Case 1: even n, exercises the tiled n_pool grid (grid = (2, 2)), no mask DMA.
    x1 = jax.random.normal(k1, (b, dim, 512), dtype=jnp.float32)
    out1 = jax.block_until_ready(attention_pool(x1, w, tile_np=128))
    ref1 = attention_pool_reference(x1, w)
    assert out1.shape == (b, dim, 256)
    assert jnp.allclose(out1, ref1, atol=1e-5, rtol=1e-5)

    # Case 2: odd n, exercises the module padding / masked-softmax path.
    x2 = jax.random.normal(k2, (b, dim, 15), dtype=jnp.float32)
    out2 = jax.block_until_ready(attention_pool(x2, w))
    ref2 = attention_pool_reference(x2, w)
    assert out2.shape == (b, dim, 8)
    assert jnp.allclose(out2, ref2, atol=1e-5, rtol=1e-5)

    # Case 3: odd n AND n_pool not a multiple of the tile -> lane-alignment
    # padding of n_pool plus the masked final pooled column.
    x3 = jax.random.normal(k3, (b, dim, 601), dtype=jnp.float32)
    out3 = jax.block_until_ready(attention_pool(x3, w, tile_np=128))
    ref3 = attention_pool_reference(x3, w)
    assert out3.shape == (b, dim, 301)
    assert jnp.allclose(out3, ref3, atol=1e-5, rtol=1e-5)

    print("KERNEL_OK")
</pallas_src>

<mosaic_0001>
module attributes {stable_mosaic.version = 11 : i64} {
  func.func @kernel(%arg0: i32, %arg1: i32, %arg2: memref<1x2x16x128xf32, #tpu.memory_space<vmem>>, %arg3: memref<16x16xf32, #tpu.memory_space<vmem>>, %arg4: memref<1x16x128xf32, #tpu.memory_space<vmem>>) attributes {dimension_semantics = [#tpu.dimension_semantics<parallel>, #tpu.dimension_semantics<parallel>], iteration_bounds = array<i64: 2, 2>, scalar_prefetch = 0 : i64, scratch_operands = 0 : i64, tpu.core_type = #tpu.core_type<tc>, window_params = [{transform_indices = @transform_0, window_bounds = array<i64: 1, 2, 16, 128>}, {pipeline_mode = #tpu.pipeline_mode<synchronous>, transform_indices = @transform_1, window_bounds = array<i64: 16, 16>}, {transform_indices = @transform_2, window_bounds = array<i64: 1, 16, 128>}]} {
    %c0 = arith.constant 0 : index
    %c0_0 = arith.constant 0 : index
    %0 = vector.load %arg3[%c0, %c0_0] : memref<16x16xf32, #tpu.memory_space<vmem>>, vector<16x16xf32>
    %c0_1 = arith.constant 0 : index
    %c0_2 = arith.constant 0 : index
    %c0_3 = arith.constant 0 : index
    %c0_4 = arith.constant 0 : index
    %1 = vector.load %arg2[%c0_1, %c0_2, %c0_3, %c0_4] : memref<1x2x16x128xf32, #tpu.memory_space<vmem>>, vector<1x1x16x128xf32>
    %2 = vector.shape_cast %1 : vector<1x1x16x128xf32> to vector<16x128xf32>
    %c0_5 = arith.constant 0 : index
    %c1 = arith.constant 1 : index
    %c0_6 = arith.constant 0 : index
    %c0_7 = arith.constant 0 : index
    %3 = vector.load %arg2[%c0_5, %c1, %c0_6, %c0_7] : memref<1x2x16x128xf32, #tpu.memory_space<vmem>>, vector<1x1x16x128xf32>
    %4 = vector.shape_cast %3 : vector<1x1x16x128xf32> to vector<16x128xf32>
    %5 = arith.subf %2, %4 : vector<16x128xf32>
    %cst = arith.constant dense<0.000000e+00> : vector<16x128xf32>
    %6 = tpu.matmul %0, %5, %cst {dimension_numbers = #tpu.dot_dimension_numbers<[1], [0], [0], [1], [0, 0, 1, 1], [], []>} : vector<16x16xf32>, vector<16x128xf32>, vector<16x128xf32> -> vector<16x128xf32>
    %cst_8 = arith.constant 0.000000e+00 : f32
    %7 = vector.broadcast %cst_8 : f32 to vector<16x128xf32>
    %8 = arith.subf %7, %6 : vector<16x128xf32>
    %9 = math.exp %8 : vector<16x128xf32>
    %cst_9 = arith.constant 1.000000e+00 : f32
    %10 = vector.broadcast %cst_9 : f32 to vector<16x128xf32>
    %11 = arith.addf %10, %9 : vector<16x128xf32>
    %cst_10 = arith.constant 1.000000e+00 : f32
    %12 = vector.broadcast %cst_10 : f32 to vector<16x128xf32>
    %13 = arith.divf %12, %11 : vector<16x128xf32>
    %14 = arith.mulf %5, %13 : vector<16x128xf32>
    %15 = arith.addf %4, %14 : vector<16x128xf32>
    %c0_11 = arith.constant 0 : index
    %c0_12 = arith.constant 0 : index
    %c0_13 = arith.constant 0 : index
    %16 = vector.load %arg4[%c0_11, %c0_12, %c0_13] : memref<1x16x128xf32, #tpu.memory_space<vmem>>, vector<1x16x128xf32>
    %17 = vector.shape_cast %16 : vector<1x16x128xf32> to vector<16x128xf32>
    %18 = vector.shape_cast %15 : vector<16x128xf32> to vector<1x16x128xf32>
    tpu.vector_store %arg4[%c0_11, %c0_12, %c0_13], %18 {strides = array<i32>} : memref<1x16x128xf32, #tpu.memory_space<vmem>>, vector<1x16x128xf32>,
    return
  }
  func.func @transform_0(%arg0: i32, %arg1: i32) -> (i32, i32, i32, i32) {
    %c0_i32 = arith.constant 0 : i32
    %c0_i32_0 = arith.constant 0 : i32
    %c0_i32_1 = arith.constant 0 : i32
    return %arg0, %c0_i32, %c0_i32_0, %arg1 : i32, i32, i32, i32
  }
  func.func @transform_1(%arg0: i32, %arg1: i32) -> (i32, i32) {
    %c0_i32 = arith.constant 0 : i32
    %c0_i32_0 = arith.constant 0 : i32
    %c0_i32_1 = arith.constant 0 : i32
    return %c0_i32, %c0_i32_0 : i32, i32
  }
  func.func @transform_2(%arg0: i32, %arg1: i32) -> (i32, i32, i32) {
    %c0_i32 = arith.constant 0 : i32
    %c0_i32_0 = arith.constant 0 : i32
    return %arg0, %c0_i32, %arg1 : i32, i32, i32
  }
}

</mosaic_0001>

<llo_original>
// kernel: tpu_custom_call.1
$region0: #{tpu_custom_call.1}
  #allocation0 [shape = 'u32[]', space=smem, size = 0x4, offset = 0x4, fixed_abs, tag = 'smem constant byte address 0x4 - core index']
  #allocation1 [shape = 'u32[144,128]{1,0:T(1,128)}', space=vmem, size = 0x12000, scoped, tag = 'internal scratch']
  %s0 = inlined_call_operand.hbm [shape: f32[2,2,16,256], index: 0, kind: input, shape index: {}]
  %s1 = inlined_call_operand.hbm [shape: f32[16,16], index: 1, kind: input, shape index: {}]
  %s2 = inlined_call_operand.hbm [shape: f32[2,16,256], index: 2, kind: output, shape index: {}]
  %s3 = sld [smem:[#allocation0]]
  $region49: #{tpu_custom_call.1} parent=0
    _
  %s5 = ssub.s32 1, %s3
  %s6 = scalar_select 0, %s5, %s3
  $region1: #{tpu_custom_call.1} parent=0
    #allocation2 [shape = 'u8[32768]{0}', space=vmem, size = 0x8000, scoped, tag = 'input window, operand 0']
    #allocation3 [shape = 's32[2]{0}', space=sflag, size = 0x8, scoped, tag = 'scoped memory for tpu_custom_call.1']
    #allocation4 [shape = 's32[2]{0}', space=sflag, size = 0x8, scoped, tag = 'scoped memory for tpu_custom_call.1']
    #allocation5 [shape = 'u8[8192]{0}', space=vmem, size = 0x2000, scoped, tag = 'input window, operand 1, single buffered']
    #allocation6 [shape = 's32[1]{0}', space=sflag, size = 0x4, scoped, tag = 'scoped memory for tpu_custom_call.1']
    #allocation7 [shape = 'u8[16384]{0}', space=vmem, size = 0x4000, scoped, tag = 'output window, operand 0']
    %7 = vsyncpa [#allocation3], 0
    %s8 = scalar_lea.sflag [#allocation3], 1
    %9 = vsyncpa %s8, 0
    %10 = vsyncpa [#allocation6], 0
    %11 = vsyncpa [#allocation4], 0
    %s12 = scalar_lea.sflag [#allocation4], 1
    %13 = vsyncpa %s12, 0
    loop: start=0, step=1, limit=6
    $region2: #{tpu_custom_call.1} parent=1 // loop_pre_header
      _
    $region3: #{tpu_custom_call.1} parent=1 // loop_header
      %s15 = sphi 0, %s19
      %p16 = scmp.ge.s32.totalorder %s15, 6
      %s22 = sphi 0, %s34
      %s23 = sphi 0, %s30
      %s24 = sphi 0, %s22
      %s25 = sphi 0, %s23
      %s26 = sphi 0, %s24
      %s27 = sphi 0, %s25
      %s39 = sphi 0, %s41
      %s42 = sphi 0, %s39
      %s43 = sphi 0, %s42
      %s59 = sphi 0, %s43
      %s63 = sphi 0, %s63
      %s65 = sphi 0, %s63
      %s66 = sphi 0, %s65
      %s80 = sphi 0, %s66
      %s88 = sphi 0, %s90
      %s91 = sphi 0, %s88
      %s92 = sphi 0, %s91
      %s108 = sphi 0, %s92
    $region4: #{tpu_custom_call.1} parent=1 // loop_header_branch
      %18 = sbr.rel (%p16) target = $region8
    $region5: #{tpu_custom_call.1} parent=1 // loop_body
      %s20 = ssub.s32 %s15, 1
      %s21 = ssub.s32 %s15, 2
      %s28 = sadd.s32 1, %s23
      %p29 = scmp.ge.s32.totalorder %s28, 2
      %s30 = scalar_select %p29, 0, %s28
      %s31 = sadd.s32 1, %s22
      %s32 = scalar_select %p29, %s31, %s22
      %p33 = scmp.ge.s32.totalorder %s32, 2
      %s34 = scalar_select %p33, 0, %s32
      %s35 = ssub.s32 %s22, %s34
      %s36 = ssub.s32 %s23, %s30
      %s37 = sor.u32 %s35, %s36
      %p38 = scmp.eq.s32.totalorder %s37, 0
      %s40 = sadd.s32 %s39, 1
      %s41 = scalar_select %p38, %s39, %s40
      %p44 = pneg %p38
      %p45 = scmp.eq.s32.totalorder %s15, 3
      %p46 = por %p44, %p45
      %p47 = scmp.ne.s32.totalorder %s39, %s42
      %p48 = scmp.eq.s32.totalorder %s15, 0
      %p49 = por %p47, %p48
      %p50 = scmp.ne.s32.totalorder %s39, %s42
      %p51 = scmp.eq.s32.totalorder %s20, 3
      %p52 = por %p50, %p51
      %p53 = scmp.ne.s32.totalorder %s42, %s43
      %p54 = scmp.eq.s32.totalorder %s20, 0
      %p55 = por %p53, %p54
      %p56 = scmp.ne.s32.totalorder %s42, %s43
      %p57 = scmp.eq.s32.totalorder %s21, 3
      %p58 = por %p56, %p57
      %p60 = scmp.ne.s32.totalorder %s43, %s59
      %p61 = scmp.eq.s32.totalorder %s21, 0
      %p62 = por %p60, %p61
      %s64 = sadd.s32 %s63, 1
      %p67 = scmp.eq.s32.totalorder %s15, 3
      %p68 = scmp.ne.s32.totalorder %s63, %s65
      %p69 = scmp.eq.s32.totalorder %s15, 0
      %p70 = por %p68, %p69
      %p71 = scmp.ne.s32.totalorder %s63, %s65
      %p72 = scmp.eq.s32.totalorder %s20, 3
      %p73 = por %p71, %p72
      %p74 = scmp.ne.s32.totalorder %s65, %s66
      %p75 = scmp.eq.s32.totalorder %s20, 0
      %p76 = por %p74, %p75
      %p77 = scmp.ne.s32.totalorder %s65, %s66
      %p78 = scmp.eq.s32.totalorder %s21, 3
      %p79 = por %p77, %p78
      %p81 = scmp.ne.s32.totalorder %s66, %s80
      %p82 = scmp.eq.s32.totalorder %s21, 0
      %p83 = por %p81, %p82
      %s84 = ssub.s32 %s22, %s34
      %s85 = ssub.s32 %s23, %s30
      %s86 = sor.u32 %s84, %s85
      %p87 = scmp.eq.s32.totalorder %s86, 0
      %s89 = sadd.s32 %s88, 1
      %s90 = scalar_select %p87, %s88, %s89
      %p93 = pneg %p87
      %p94 = scmp.eq.s32.totalorder %s15, 3
      %p95 = por %p93, %p94
      %p96 = scmp.ne.s32.totalorder %s88, %s91
      %p97 = scmp.eq.s32.totalorder %s15, 0
      %p98 = por %p96, %p97
      %p99 = scmp.ne.s32.totalorder %s88, %s91
      %p100 = scmp.eq.s32.totalorder %s20, 3
      %p101 = por %p99, %p100
      %p102 = scmp.ne.s32.totalorder %s91, %s92
      %p103 = scmp.eq.s32.totalorder %s20, 0
      %p104 = por %p102, %p103
      %p105 = scmp.ne.s32.totalorder %s91, %s92
      %p106 = scmp.eq.s32.totalorder %s21, 3
      %p107 = por %p105, %p106
      %p109 = scmp.ne.s32.totalorder %s92, %s108
      %p110 = scmp.eq.s32.totalorder %s21, 0
      %p111 = por %p109, %p110
      %p112 = scmp.le.s32.totalorder 1, %s15
      %p113 = scmp.lt.s32.totalorder %s15, 5
      %p114 = pnand %p112, %p113
      %p115 = pneg %p114
      // Predicated region
      $region9: #{tpu_custom_call.1} parent=5 // pred_check
        _
      $region10: #{tpu_custom_call.1} parent=5 // pred_check_branch
        %117 = sbr.rel (%p114) target = $region12
      $region11: #{tpu_custom_call.1} parent=5 // pred_region
        %s118 = ssub.s32 %s15, 1
        // Predicated region
        $region13: #{tpu_custom_call.1} parent=11 // pred_check
          %p119 = pneg %p76
        $region14: #{tpu_custom_call.1} parent=11 // pred_check_branch
          %121 = sbr.rel (%p119) target = $region16
        $region15: #{tpu_custom_call.1} parent=11 // pred_region
          %s123 = ssub.s32 256, 256
          %124 = vsyncadd [#allocation6], %s123
          %s125 = sshll.u32 [#allocation5], 4
          %s126 = int_to_ptr.vmem [resolvable:$true] %s125
          %131 = dma.hbm_to_vmem [thread:$0]  %s1, 256, %s126, [#allocation6], 128, 128, 8
        $region16: #{tpu_custom_call.1} parent=11 // pred_fallthru
          _
      $region12: #{tpu_custom_call.1} parent=5 // pred_fallthru
        _
      %p132 = scmp.lt.s32.totalorder %s15, 4
      // Predicated region
      $region17: #{tpu_custom_call.1} parent=5 // pred_check
        %p133 = pneg %p132
      $region18: #{tpu_custom_call.1} parent=5 // pred_check_branch
        %135 = sbr.rel (%p133) target = $region20
      $region19: #{tpu_custom_call.1} parent=5 // pred_region
        // Predicated region
        $region21: #{tpu_custom_call.1} parent=19 // pred_check
          %p136 = pneg %p49
        $region22: #{tpu_custom_call.1} parent=19 // pred_check_branch
          %138 = sbr.rel (%p136) target = $region24
        $region23: #{tpu_custom_call.1} parent=19 // pred_region
          %s139 = sand.u32 %s39, 1
          %s140 = scalar_lea.sflag [#allocation3], %s139
          %s141 = sand.u32 %s39, 1
          %s142 = smul.addr %s141, 32
          %s143 = scalar_lea.vmem [#allocation2], %s142
          %s145 = ssub.s32 512, 512
          %146 = vsyncadd %s140, %s145
          %s147 = smul.addr %s22, 8
          %s148 = sadd.s32 %s23, %s147
          %s149 = smul.addr %s148, 128
          %s150 = scalar_lea.hbm %s0, %s149
          %s151 = sshll.u32 %s143, 4
          %s152 = int_to_ptr.vmem [resolvable:$true] %s151
          %157 = dma.hbm_to_vmem [thread:$0]  %s150, 512, %s152, %s140, 256, 128, 8
        $region24: #{tpu_custom_call.1} parent=19 // pred_fallthru
          _
      $region20: #{tpu_custom_call.1} parent=5 // pred_fallthru
        _
      %p158 = scmp.le.s32.totalorder 1, %s15
      %p159 = scmp.lt.s32.totalorder %s15, 5
      %p160 = pnand %p158, %p159
      %p161 = pneg %p160
      // Predicated region
      $region25: #{tpu_custom_call.1} parent=5 // pred_check
        _
      $region26: #{tpu_custom_call.1} parent=5 // pred_check_branch
        %163 = sbr.rel (%p160) target = $region28
      $region27: #{tpu_custom_call.1} parent=5 // pred_region
        %s164 = ssub.s32 %s15, 1
        %s165 = sand.u32 %s42, 1
        %s166 = scalar_lea.sflag [#allocation3], %s165
        %s167 = sand.u32 %s42, 1
        %s168 = smul.addr %s167, 32
        %s169 = scalar_lea.vmem [#allocation2], %s168
        // Predicated region
        $region29: #{tpu_custom_call.1} parent=27 // pred_check
          %p170 = pneg %p55
        $region30: #{tpu_custom_call.1} parent=27 // pred_check_branch
          %172 = sbr.rel (%p170) target = $region32
        $region31: #{tpu_custom_call.1} parent=27 // pred_region
          %173 = dma.done %s166, 512
        $region32: #{tpu_custom_call.1} parent=27 // pred_fallthru
          _
        // Predicated region
        $region33: #{tpu_custom_call.1} parent=27 // pred_check
          %p174 = pneg %p76
        $region34: #{tpu_custom_call.1} parent=27 // pred_check_branch
          %176 = sbr.rel (%p174) target = $region36
        $region35: #{tpu_custom_call.1} parent=27 // pred_region
          %177 = dma.done [#allocation6], 256
        $region36: #{tpu_custom_call.1} parent=27 // pred_fallthru
          _
        %s178 = sand.u32 %s42, 1
        %s179 = scalar_lea.sflag [#allocation3], %s178
        %s180 = sand.u32 %s42, 1
        %s181 = smul.addr %s180, 32
        %s182 = scalar_lea.vmem [#allocation2], %s181
        %p183 = pneg %p55
        %p184 = pneg %p52
        %p185 = pneg %p76
        %p186 = pneg %p73
        %p187 = pneg %p104
        %p188 = pneg %p101
        %s189 = sand.u32 %s91, 1
        %s190 = scalar_lea.sflag [#allocation4], %s189
        %s191 = sand.u32 %s91, 1
        %s192 = smul.addr %s191, 16
        %s193 = scalar_lea.vmem [#allocation7], %s192
        %v194 = vld [vmem:[#allocation5] sm:$0xff]
        %v195 = vld [vmem:[#allocation5 + $0x8] sm:$0xff]
        %v196 = vld [vmem:[%s169] sm:$0xff]
        %v197 = vld [vmem:[%s169 + $0x8] sm:$0xff]
        %s198 = scalar_lea.vmem %s169, 16 [#allocation2]
        %v199 = vld [vmem:[%s198] sm:$0xff]
        %v200 = vld [vmem:[%s198 + $0x8] sm:$0xff]
        %v201 = vsub.f32 %v196, %v199
        %v202 = vsub.f32 %v197, %v200
        %vm203 = vcmask 130048
        %v205 = vsel %vm203, %v194, 0
        %v208 = vsel %vm203, %v195, 0
        %210 = vmatprep.subr.mxu0 0.0
        %211 = vmatpush1.msra.mxu0 %v201
        %212 = vmatprep.subr.mxu0 0.0
        %213 = vmatpush1.msra.mxu0 %v202
        %214 = vmatprep.subr.mxu0 0.0
        %215 = vmatpush1.msra.mxu0 0.0
        %216 = vmatprep.subr.mxu0 0.0
        %217 = vmatpush1.msra.mxu0 0.0
        %218 = vmatprep.subr.mxu0 0.0
        %219 = vmatpush1.msra.mxu0 0.0
        %220 = vmatprep.subr.mxu0 0.0
        %221 = vmatpush1.msra.mxu0 0.0
        %222 = vmatprep.subr.mxu0 0.0
        %223 = vmatpush1.msra.mxu0 0.0
        %224 = vmatprep.subr.mxu0 0.0
        %225 = vmatpush1.msra.mxu0 0.0
        %226 = vmatprep.subr.mxu0 0.0
        %227 = vmatpush1.msra.mxu0 0.0
        %228 = vmatprep.subr.mxu0 0.0
        %229 = vmatpush1.msra.mxu0 0.0
        %230 = vmatprep.subr.mxu0 0.0
        %231 = vmatpush1.msra.mxu0 0.0
        %232 = vmatprep.subr.mxu0 0.0
        %233 = vmatpush1.msra.mxu0 0.0
        %234 = vmatprep.subr.mxu0 0.0
        %235 = vmatpush1.msra.mxu0 0.0
        %236 = vmatprep.subr.mxu0 0.0
        %237 = vmatpush1.msra.mxu0 0.0
        %238 = vmatprep.subr.mxu0 0.0
        %239 = vmatpush1.msra.mxu0 0.0
        %240 = vmatprep.subr.mxu0 0.0
        %241 = vmatpush1.msra.mxu0 0.0
        %242 = vmatprep.subr.mxu0 0.0
        %243 = vmatpush1.msra.mxu0 0.0
        %244 = vmatprep.subr.mxu0 0.0
        %245 = vmatpush1.msra.mxu0 0.0
        %246 = vmatprep.subr.mxu0 0.0
        %247 = vmatpush1.msra.mxu0 0.0
        %248 = vmatprep.subr.mxu0 0.0
        %249 = vmatpush1.msra.mxu0 0.0
        %250 = vmatprep.subr.mxu0 0.0
        %251 = vmatpush1.msra.mxu0 0.0
        %252 = vmatprep.subr.mxu0 0.0
        %253 = vmatpush1.msra.mxu0 0.0
        %254 = vmatprep.subr.mxu0 0.0
        %255 = vmatpush1.msra.mxu0 0.0
        %256 = vmatprep.subr.mxu0 0.0
        %257 = vmatpush1.msra.mxu0 0.0
        %258 = vmatprep.subr.mxu0 0.0
        %259 = vmatpush1.msra.mxu0 0.0
        %260 = vmatprep.subr.mxu0 0.0
        %261 = vmatpush1.msra.mxu0 0.0
        %262 = vmatprep.subr.mxu0 0.0
        %263 = vmatpush1.msra.mxu0 0.0
        %264 = vmatprep.subr.mxu0 0.0
        %265 = vmatpush1.msra.mxu0 0.0
        %266 = vmatprep.subr.mxu0 0.0
        %267 = vmatpush1.msra.mxu0 0.0
        %268 = vmatprep.subr.mxu0 0.0
        %269 = vmatpush1.msra.mxu0 0.0
        %270 = vmatprep.subr.mxu0 0.0
        %271 = vmatpush1.msra.mxu0 0.0
        %272 = vmatprep.subr.mxu0 0.0
        %273 = vmatpush1.msra.mxu0 0.0
        %274 = vmatprep.mubr.f32.mxu0 0.0
        %275 = vmatmul.mubr.f32.gmra.mrb[0].mxu0 %v205
        %v276 = vpop.f32.mrb[0].mxu0
        %v277 = vadd.f32 0.0, %v276
        %v278 = vpop.f32.mrb[0].mxu0
        %279 = vmatprep.mubr.f32.mxu0 0.0
        %280 = vmatmul.mubr.f32.gmra.mrb[0].mxu0 %v208
        %v281 = vpop.f32.mrb[0].mxu0
        %v282 = vadd.f32 0.0, %v281
        %v283 = vpop.f32.mrb[0].mxu0
        %284 = vdwg.mxu0
        %v285 = vsub.f32 0.0, %v277
        %v286 = vsub.f32 0.0, %v282
        %v287 = vmul.f32 %v285, 1.442695
        %v288 = vpow.pop %v287
        %v289 = vmul.f32 %v286, 1.442695
        %v290 = vpow.pop %v289
        %v291 = vadd.f32 %v288, 1.0
        %v292 = vadd.f32 %v290, 1.0
        %v293 = vrcp.pop %v291
        %v294 = vmul.f32 1.0, %v293
        %v295 = vrcp.pop %v292
        %v296 = vmul.f32 1.0, %v295
        %v297 = vmul.f32 %v201, %v294
        %v298 = vmul.f32 %v202, %v296
        %v299 = vadd.f32 %v199, %v297
        %v300 = vadd.f32 %v200, %v298
        %301 = vst [vmem:[%s193] sm:$0xff] %v299
        %302 = vst [vmem:[%s193 + $0x8] sm:$0xff] %v300
        %s303 = sand.u32 %s91, 1
        %s304 = scalar_lea.sflag [#allocation4], %s303
        %s305 = sand.u32 %s91, 1
        %s306 = smul.addr %s305, 16
        %s307 = scalar_lea.vmem [#allocation7], %s306
        // Predicated region
        $region37: #{tpu_custom_call.1} parent=27 // pred_check
          %p308 = pneg %p101
        $region38: #{tpu_custom_call.1} parent=27 // pred_check_branch
          %310 = sbr.rel (%p308) target = $region40
        $region39: #{tpu_custom_call.1} parent=27 // pred_region
          %s312 = ssub.s32 256, 256
          %313 = vsyncadd %s304, %s312
          %s314 = smul.addr %s24, 4
          %s315 = sadd.s32 %s25, %s314
          %s316 = smul.addr %s315, 128
          %s317 = scalar_lea.hbm %s2, %s316
          %s318 = sshll.u32 %s307, 4
          %s319 = int_to_ptr.vmem [resolvable:$true] %s318
          %324 = dma.vmem_to_hbm [thread:$0]  %s319, 256, %s317, %s304, 128, 256, 8
        $region40: #{tpu_custom_call.1} parent=27 // pred_fallthru
          _
      $region28: #{tpu_custom_call.1} parent=5 // pred_fallthru
        _
      %p325 = scmp.le.s32.totalorder 2, %s15
      // Predicated region
      $region41: #{tpu_custom_call.1} parent=5 // pred_check
        %p326 = pneg %p325
      $region42: #{tpu_custom_call.1} parent=5 // pred_check_branch
        %328 = sbr.rel (%p326) target = $region44
      $region43: #{tpu_custom_call.1} parent=5 // pred_region
        %s329 = ssub.s32 %s15, 2
        // Predicated region
        $region45: #{tpu_custom_call.1} parent=43 // pred_check
          %p330 = pneg %p107
        $region46: #{tpu_custom_call.1} parent=43 // pred_check_branch
          %332 = sbr.rel (%p330) target = $region48
        $region47: #{tpu_custom_call.1} parent=43 // pred_region
          %s333 = sand.u32 %s92, 1
          %s334 = scalar_lea.sflag [#allocation4], %s333
          %s335 = sand.u32 %s92, 1
          %s336 = smul.addr %s335, 16
          %s337 = scalar_lea.vmem [#allocation7], %s336
          %338 = dma.done %s334, 256
        $region48: #{tpu_custom_call.1} parent=43 // pred_fallthru
          _
      $region44: #{tpu_custom_call.1} parent=5 // pred_fallthru
        _
    $region6: #{tpu_custom_call.1} parent=1 // loop_footer
      %s19 = sadd.s32 1, %s15
    $region7: #{tpu_custom_call.1} parent=1 // loop_footer_branch
      %14 = sbr.rel target = $region3
    $region8: #{tpu_custom_call.1} parent=1 // loop_exit
      _
    %339 = vsyncpa [#allocation3], 1
    %s340 = scalar_lea.sflag [#allocation3], 1
    %341 = vsyncpa %s340, 1
    %342 = vsyncpa [#allocation6], 1
    %343 = vsyncpa [#allocation4], 1
    %s344 = scalar_lea.sflag [#allocation4], 1
    %345 = vsyncpa %s344, 1

</llo_original>
